<compile_context>
chip_gen: v7x
topology: tpu7x:2x2x1
jax: 0.10.0
libtpu: 0.0.40
codegen_flags: <defaults>
</compile_context>

<pallas_src>
import functools

import jax
import jax.numpy as jnp
from jax.experimental import pallas as pl
from jax.experimental.pallas import tpu as pltpu

EPS = 1e-6  # matches torch.nn.functional.pairwise_distance default eps


def _triplet_kernel(x_ref, w_ref, b_ref, y_ref, z_ref, ex_ref, d_ref):
    # --- embeddingnet_att: Linear embedding on the MXU (f32 accumulate) ----
    ex = jnp.dot(x_ref[...], w_ref[...],
                 preferred_element_type=jnp.float32) + b_ref[...]
    ex_ref[...] = ex.astype(ex_ref.dtype)

    # --- pairwise L2 distances (VPU elementwise + XLU lane reduce) ----------
    diff_a = ex - y_ref[...] + EPS
    diff_b = ex - z_ref[...] + EPS
    da = jnp.sqrt(jnp.sum(diff_a * diff_a, axis=-1))   # (tm,)
    db = jnp.sqrt(jnp.sum(diff_b * diff_b, axis=-1))   # (tm,)
    # Single lane-dense store of the whole (2, tm) block (batch on lanes)
    # instead of two separate masked single-row writes.
    d_ref[...] = jnp.stack([da, db], axis=0)


def _round_down(v, m):
    return (v // m) * m


@functools.partial(jax.jit, static_argnames=("tm",))
def triplet_network(x, w, b, y, z, *, tm=1024):
    """Returns (dist_a, dist_b, embedded_x, embedded_y, embedded_z).

    tm: max batch rows per grid step. Memory-bound kernel -> bigger tiles are
    better (85%+ of HBM roofline at 512-1024). VMEM cost is
    2 * tm * (D_in + 3*D_emb + 2) * 4 bytes for the double-buffered tiles
    (~3.5 MiB at tm=1024, D_in=32, D_emb=128), so it fits every generation
    including v7x (64 MiB). tm is capped so the grid has >= 2 steps, letting
    v7x shard the batch across both TensorCores.
    """
    B, D_in = x.shape
    D_emb = w.shape[1]

    if B <= 128:
        # Single full block; block shape == full array dims satisfies the
        # (8, 128) tiling rule. Launch-bound anyway at this size.
        tm_eff = B
    else:
        # 128-aligned blocks; keep at least 2 grid steps (megacore + overlap).
        tm_eff = min(tm, max(128, _round_down(B // 2, 128)))
    grid = (pl.cdiv(B, tm_eff),)

    # VMEM: double-buffered per-step tiles + (tiny) resident W, b + slack.
    tile_bytes = 4 * (tm_eff * D_in          # x tile (f32)
                      + 2 * tm_eff * D_emb   # y, z tiles
                      + tm_eff * D_emb       # embedded_x out tile
                      + 2 * tm_eff)          # lane-dense dists out tile
    resident_bytes = 4 * (D_in * D_emb + D_emb)   # W + b
    vmem_limit = 2 * (tile_bytes + resident_bytes) + (4 << 20)

    cost = pl.CostEstimate(
        flops=2 * B * D_in * D_emb + 8 * B * D_emb,
        transcendentals=0,
        bytes_accessed=4 * (x.size + w.size + b.size + y.size + z.size
                            + B * D_emb + 2 * B),
    )

    ex, dists = pl.pallas_call(
        _triplet_kernel,
        out_shape=(
            jax.ShapeDtypeStruct((B, D_emb), jnp.float32),   # embedded_x
            jax.ShapeDtypeStruct((2, B), jnp.float32),       # [dist_a; dist_b]
        ),
        grid=grid,
        in_specs=[
            pl.BlockSpec((tm_eff, D_in), lambda i: (i, 0)),   # x tile
            pl.BlockSpec((D_in, D_emb), lambda i: (0, 0)),    # W, VMEM-resident
            pl.BlockSpec((1, D_emb), lambda i: (0, 0)),       # b, VMEM-resident
            pl.BlockSpec((tm_eff, D_emb), lambda i: (i, 0)),  # y tile
            pl.BlockSpec((tm_eff, D_emb), lambda i: (i, 0)),  # z tile
        ],
        out_specs=(
            pl.BlockSpec((tm_eff, D_emb), lambda i: (i, 0)),  # embedded_x tile
            pl.BlockSpec((2, tm_eff), lambda i: (0, i)),      # lane-dense dists
        ),
        compiler_params=pltpu.CompilerParams(
            dimension_semantics=("parallel",),
            vmem_limit_bytes=vmem_limit,
        ),
        cost_estimate=cost,
    )(x, w, b, y, z)

    # PyTorch pairwise_distance returns shape [B] (keepdim=False default).
    return dists[0], dists[1], ex, y, z


if __name__ == "__main__":
    key = jax.random.PRNGKey(0)
    k_x, k_y, k_z, k_w, k_b = jax.random.split(key, 5)

    # Small shapes that still exercise a multi-step grid AND the clipped,
    # non-divisible tail block: 320 rows = 2 full 128-row tiles + a 64-row tail.
    B, D_in, D_emb = 320, 32, 128
    x = jax.random.normal(k_x, (B, D_in), dtype=jnp.float32)
    # y, z are already embeddings (passed through untouched, as in the module)
    y = jax.random.normal(k_y, (B, D_emb), dtype=jnp.float32)
    z = jax.random.normal(k_z, (B, D_emb), dtype=jnp.float32)

    # Deterministic parameters for the synthetic embeddingnet_att (Linear).
    w = jax.random.normal(k_w, (D_in, D_emb), dtype=jnp.float32) * 0.05
    b_param = jax.random.normal(k_b, (1, D_emb), dtype=jnp.float32) * 0.01

    out = triplet_network(x, w, b_param, y, z)
    dist_a, dist_b, emb_x, emb_y, emb_z = jax.block_until_ready(out)

    # Pure-JAX reference (f32 math, same eps convention as F.pairwise_distance).
    ex_ref = jnp.dot(x, w, preferred_element_type=jnp.float32) + b_param
    da_ref = jnp.sqrt(jnp.sum((ex_ref - y + EPS) ** 2, axis=-1))
    db_ref = jnp.sqrt(jnp.sum((ex_ref - z + EPS) ** 2, axis=-1))

    assert dist_a.shape == (B,) and dist_b.shape == (B,)
    assert emb_x.shape == (B, D_emb)
    assert jnp.allclose(emb_x, ex_ref, rtol=1e-2, atol=1e-2)
    assert jnp.allclose(dist_a, da_ref, rtol=1e-2, atol=1e-2)
    assert jnp.allclose(dist_b, db_ref, rtol=1e-2, atol=1e-2)
    assert jnp.array_equal(emb_y, y) and jnp.array_equal(emb_z, z)

    print("KERNEL_OK")
</pallas_src>

<mosaic_0001>
module attributes {stable_mosaic.version = 11 : i64} {
  func.func @_triplet_kernel(%arg0: i32, %arg1: memref<128x32xf32, #tpu.memory_space<vmem>>, %arg2: memref<32x128xf32, #tpu.memory_space<vmem>>, %arg3: memref<1x128xf32, #tpu.memory_space<vmem>>, %arg4: memref<128x128xf32, #tpu.memory_space<vmem>>, %arg5: memref<128x128xf32, #tpu.memory_space<vmem>>, %arg6: memref<128x128xf32, #tpu.memory_space<vmem>>, %arg7: memref<2x128xf32, #tpu.memory_space<vmem>>) attributes {dimension_semantics = [#tpu.dimension_semantics<parallel>], iteration_bounds = array<i64: 3>, scalar_prefetch = 0 : i64, scratch_operands = 0 : i64, tpu.core_type = #tpu.core_type<tc>, window_params = [{transform_indices = @transform_0, window_bounds = array<i64: 128, 32>}, {pipeline_mode = #tpu.pipeline_mode<synchronous>, transform_indices = @transform_1, window_bounds = array<i64: 32, 128>}, {pipeline_mode = #tpu.pipeline_mode<synchronous>, transform_indices = @transform_2, window_bounds = array<i64: 1, 128>}, {transform_indices = @transform_3, window_bounds = array<i64: 128, 128>}, {transform_indices = @transform_4, window_bounds = array<i64: 128, 128>}, {transform_indices = @transform_5, window_bounds = array<i64: 128, 128>}, {transform_indices = @transform_6, window_bounds = array<i64: 2, 128>}]} {
    %c0 = arith.constant 0 : index
    %c0_0 = arith.constant 0 : index
    %0 = vector.load %arg1[%c0, %c0_0] : memref<128x32xf32, #tpu.memory_space<vmem>>, vector<128x32xf32>
    %c0_1 = arith.constant 0 : index
    %c0_2 = arith.constant 0 : index
    %1 = vector.load %arg2[%c0_1, %c0_2] : memref<32x128xf32, #tpu.memory_space<vmem>>, vector<32x128xf32>
    %cst = arith.constant dense<0.000000e+00> : vector<128x128xf32>
    %2 = tpu.matmul %0, %1, %cst {dimension_numbers = #tpu.dot_dimension_numbers<[1], [0], [0], [1], [0, 0, 1, 1], [], []>} : vector<128x32xf32>, vector<32x128xf32>, vector<128x128xf32> -> vector<128x128xf32>
    %c0_3 = arith.constant 0 : index
    %c0_4 = arith.constant 0 : index
    %3 = vector.load %arg3[%c0_3, %c0_4] : memref<1x128xf32, #tpu.memory_space<vmem>>, vector<1x128xf32>
    %4 = vector.broadcast %3 : vector<1x128xf32> to vector<128x128xf32>
    %5 = arith.addf %2, %4 : vector<128x128xf32>
    %c0_5 = arith.constant 0 : index
    %c0_6 = arith.constant 0 : index
    %6 = vector.load %arg6[%c0_5, %c0_6] : memref<128x128xf32, #tpu.memory_space<vmem>>, vector<128x128xf32>
    tpu.vector_store %arg6[%c0_5, %c0_6], %5 {strides = array<i32>} : memref<128x128xf32, #tpu.memory_space<vmem>>, vector<128x128xf32>,
    %c0_7 = arith.constant 0 : index
    %c0_8 = arith.constant 0 : index
    %7 = vector.load %arg4[%c0_7, %c0_8] : memref<128x128xf32, #tpu.memory_space<vmem>>, vector<128x128xf32>
    %8 = arith.subf %5, %7 : vector<128x128xf32>
    %cst_9 = arith.constant 9.99999997E-7 : f32
    %9 = vector.broadcast %cst_9 : f32 to vector<128x128xf32>
    %10 = arith.addf %8, %9 : vector<128x128xf32>
    %c0_10 = arith.constant 0 : index
    %c0_11 = arith.constant 0 : index
    %11 = vector.load %arg5[%c0_10, %c0_11] : memref<128x128xf32, #tpu.memory_space<vmem>>, vector<128x128xf32>
    %12 = arith.subf %5, %11 : vector<128x128xf32>
    %cst_12 = arith.constant 9.99999997E-7 : f32
    %13 = vector.broadcast %cst_12 : f32 to vector<128x128xf32>
    %14 = arith.addf %12, %13 : vector<128x128xf32>
    %15 = arith.mulf %10, %10 : vector<128x128xf32>
    %cst_13 = arith.constant dense<0.000000e+00> : vector<128xf32>
    %16 = vector.multi_reduction <add>, %15, %cst_13 [1] : vector<128x128xf32> to vector<128xf32>
    %17 = math.sqrt %16 : vector<128xf32>
    %18 = arith.mulf %14, %14 : vector<128x128xf32>
    %cst_14 = arith.constant dense<0.000000e+00> : vector<128xf32>
    %19 = vector.multi_reduction <add>, %18, %cst_14 [1] : vector<128x128xf32> to vector<128xf32>
    %20 = math.sqrt %19 : vector<128xf32>
    %21 = vector.shape_cast %17 : vector<128xf32> to vector<1x128xf32>
    %22 = vector.shape_cast %20 : vector<128xf32> to vector<1x128xf32>
    %23 = tpu.concatenate %21, %22 in 0 : vector<1x128xf32>, vector<1x128xf32> -> vector<2x128xf32>
    %c0_15 = arith.constant 0 : index
    %c0_16 = arith.constant 0 : index
    %24 = vector.load %arg7[%c0_15, %c0_16] : memref<2x128xf32, #tpu.memory_space<vmem>>, vector<2x128xf32>
    tpu.vector_store %arg7[%c0_15, %c0_16], %23 {strides = array<i32>} : memref<2x128xf32, #tpu.memory_space<vmem>>, vector<2x128xf32>,
    return
  }
  func.func @transform_0(%arg0: i32) -> (i32, i32) {
    %c0_i32 = arith.constant 0 : i32
    %c0_i32_0 = arith.constant 0 : i32
    return %arg0, %c0_i32 : i32, i32
  }
  func.func @transform_1(%arg0: i32) -> (i32, i32) {
    %c0_i32 = arith.constant 0 : i32
    %c0_i32_0 = arith.constant 0 : i32
    %c0_i32_1 = arith.constant 0 : i32
    return %c0_i32, %c0_i32_0 : i32, i32
  }
  func.func @transform_2(%arg0: i32) -> (i32, i32) {
    %c0_i32 = arith.constant 0 : i32
    %c0_i32_0 = arith.constant 0 : i32
    %c0_i32_1 = arith.constant 0 : i32
    return %c0_i32, %c0_i32_0 : i32, i32
  }
  func.func @transform_3(%arg0: i32) -> (i32, i32) {
    %c0_i32 = arith.constant 0 : i32
    %c0_i32_0 = arith.constant 0 : i32
    return %arg0, %c0_i32 : i32, i32
  }
  func.func @transform_4(%arg0: i32) -> (i32, i32) {
    %c0_i32 = arith.constant 0 : i32
    %c0_i32_0 = arith.constant 0 : i32
    return %arg0, %c0_i32 : i32, i32
  }
  func.func @transform_5(%arg0: i32) -> (i32, i32) {
    %c0_i32 = arith.constant 0 : i32
    %c0_i32_0 = arith.constant 0 : i32
    return %arg0, %c0_i32 : i32, i32
  }
  func.func @transform_6(%arg0: i32) -> (i32, i32) {
    %c0_i32 = arith.constant 0 : i32
    %c0_i32_0 = arith.constant 0 : i32
    return %c0_i32, %arg0 : i32, i32
  }
}

</mosaic_0001>

<llo_original>
// kernel: triplet_network.1
$region0: #{triplet_network.1}
  #allocation0 [shape = 'u32[]', space=smem, size = 0x4, offset = 0x4, fixed_abs, tag = 'smem constant byte address 0x4 - core index']
  #allocation1 [shape = 'u32[144,128]{1,0:T(1,128)}', space=vmem, size = 0x12000, scoped, tag = 'internal scratch']
  %s0 = inlined_call_operand.vmem [shape: f32[320,32], index: 0, kind: input, shape index: {}]
  %s1 = inlined_call_operand.vmem [shape: f32[32,128], index: 1, kind: input, shape index: {}]
  %s2 = inlined_call_operand.vmem [shape: f32[1,128], index: 2, kind: input, shape index: {}]
  %s3 = inlined_call_operand.vmem [shape: f32[320,128], index: 3, kind: input, shape index: {}]
  %s4 = inlined_call_operand.hbm [shape: f32[320,128], index: 4, kind: input, shape index: {}]
  %s5 = inlined_call_operand.hbm [shape: f32[320,128], index: 5, kind: output, shape index: {0}]
  %s6 = inlined_call_operand.vmem [shape: f32[2,320], index: 6, kind: output, shape index: {1}]
  %7 = xla_tuple %s5, %s6
  %s8 = sld [smem:[#allocation0]]
  $region65: #{triplet_network.1} parent=0
    _
  %s10 = ssub.s32 1, %s8
  %s11 = scalar_select 0, %s10, %s8
  $region1: #{triplet_network.1} parent=0
    #allocation2 [shape = 'u8[131072]{0}', space=vmem, size = 0x20000, scoped, tag = 'input window, operand 4']
    #allocation3 [shape = 's32[2]{0}', space=sflag, size = 0x8, scoped, tag = 'scoped memory for triplet_network.1']
    #allocation4 [shape = 's32[2]{0}', space=sflag, size = 0x8, scoped, tag = 'scoped memory for triplet_network.1']
    #allocation5 [shape = 'u8[131072]{0}', space=vmem, size = 0x20000, scoped, tag = 'output window, operand 0']
    %12 = vsyncpa [#allocation3], 0
    %s13 = scalar_lea.sflag [#allocation3], 1
    %14 = vsyncpa %s13, 0
    %15 = vsyncpa [#allocation4], 0
    %s16 = scalar_lea.sflag [#allocation4], 1
    %17 = vsyncpa %s16, 0
    loop: start=0, step=1, limit=5
    $region2: #{triplet_network.1} parent=1 // loop_pre_header
      _
    $region3: #{triplet_network.1} parent=1 // loop_header
      %s19 = sphi 0, %s23
      %p20 = scmp.ge.s32.totalorder %s19, 5
      %s29 = sphi 0, %s31
      %s32 = sphi 0, %s29
      %s33 = sphi 0, %s32
      %s49 = sphi 0, %s33
      %s53 = sphi 0, %s53
      %s55 = sphi 0, %s53
      %s56 = sphi 0, %s55
      %s70 = sphi 0, %s56
      %s74 = sphi 0, %s74
      %s76 = sphi 0, %s74
      %s77 = sphi 0, %s76
      %s91 = sphi 0, %s77
      %s97 = sphi 0, %s99
      %s100 = sphi 0, %s97
      %s101 = sphi 0, %s100
      %s117 = sphi 0, %s101
      %s123 = sphi 0, %s125
      %s126 = sphi 0, %s123
      %s127 = sphi 0, %s126
      %s143 = sphi 0, %s127
      %s149 = sphi 0, %s151
      %s152 = sphi 0, %s149
      %s153 = sphi 0, %s152
      %s169 = sphi 0, %s153
      %s175 = sphi 0, %s177
      %s178 = sphi 0, %s175
      %s179 = sphi 0, %s178
      %s195 = sphi 0, %s179
    $region4: #{triplet_network.1} parent=1 // loop_header_branch
      %22 = sbr.rel (%p20) target = $region8
    $region5: #{triplet_network.1} parent=1 // loop_body
      %s24 = ssub.s32 %s19, 1
      %s25 = ssub.s32 %s19, 2
      %s26 = sadd.s32 %s19, 1
      %s27 = ssub.s32 %s19, %s26
      %p28 = scmp.eq.s32.totalorder %s27, 0
      %s30 = sadd.s32 %s29, 1
      %s31 = scalar_select %p28, %s29, %s30
      %p34 = pneg %p28
      %p35 = scmp.eq.s32.totalorder %s19, 2
      %p36 = por %p34, %p35
      %p37 = scmp.ne.s32.totalorder %s29, %s32
      %p38 = scmp.eq.s32.totalorder %s19, 0
      %p39 = por %p37, %p38
      %p40 = scmp.ne.s32.totalorder %s29, %s32
      %p41 = scmp.eq.s32.totalorder %s24, 2
      %p42 = por %p40, %p41
      %p43 = scmp.ne.s32.totalorder %s32, %s33
      %p44 = scmp.eq.s32.totalorder %s24, 0
      %p45 = por %p43, %p44
      %p46 = scmp.ne.s32.totalorder %s32, %s33
      %p47 = scmp.eq.s32.totalorder %s25, 2
      %p48 = por %p46, %p47
      %p50 = scmp.ne.s32.totalorder %s33, %s49
      %p51 = scmp.eq.s32.totalorder %s25, 0
      %p52 = por %p50, %p51
      %s54 = sadd.s32 %s53, 1
      %p57 = scmp.eq.s32.totalorder %s19, 2
      %p58 = scmp.ne.s32.totalorder %s53, %s55
      %p59 = scmp.eq.s32.totalorder %s19, 0
      %p60 = por %p58, %p59
      %p61 = scmp.ne.s32.totalorder %s53, %s55
      %p62 = scmp.eq.s32.totalorder %s24, 2
      %p63 = por %p61, %p62
      %p64 = scmp.ne.s32.totalorder %s55, %s56
      %p65 = scmp.eq.s32.totalorder %s24, 0
      %p66 = por %p64, %p65
      %p67 = scmp.ne.s32.totalorder %s55, %s56
      %p68 = scmp.eq.s32.totalorder %s25, 2
      %p69 = por %p67, %p68
      %p71 = scmp.ne.s32.totalorder %s56, %s70
      %p72 = scmp.eq.s32.totalorder %s25, 0
      %p73 = por %p71, %p72
      %s75 = sadd.s32 %s74, 1
      %p78 = scmp.eq.s32.totalorder %s19, 2
      %p79 = scmp.ne.s32.totalorder %s74, %s76
      %p80 = scmp.eq.s32.totalorder %s19, 0
      %p81 = por %p79, %p80
      %p82 = scmp.ne.s32.totalorder %s74, %s76
      %p83 = scmp.eq.s32.totalorder %s24, 2
      %p84 = por %p82, %p83
      %p85 = scmp.ne.s32.totalorder %s76, %s77
      %p86 = scmp.eq.s32.totalorder %s24, 0
      %p87 = por %p85, %p86
      %p88 = scmp.ne.s32.totalorder %s76, %s77
      %p89 = scmp.eq.s32.totalorder %s25, 2
      %p90 = por %p88, %p89
      %p92 = scmp.ne.s32.totalorder %s77, %s91
      %p93 = scmp.eq.s32.totalorder %s25, 0
      %p94 = por %p92, %p93
      %s95 = ssub.s32 %s19, %s26
      %p96 = scmp.eq.s32.totalorder %s95, 0
      %s98 = sadd.s32 %s97, 1
      %s99 = scalar_select %p96, %s97, %s98
      %p102 = pneg %p96
      %p103 = scmp.eq.s32.totalorder %s19, 2
      %p104 = por %p102, %p103
      %p105 = scmp.ne.s32.totalorder %s97, %s100
      %p106 = scmp.eq.s32.totalorder %s19, 0
      %p107 = por %p105, %p106
      %p108 = scmp.ne.s32.totalorder %s97, %s100
      %p109 = scmp.eq.s32.totalorder %s24, 2
      %p110 = por %p108, %p109
      %p111 = scmp.ne.s32.totalorder %s100, %s101
      %p112 = scmp.eq.s32.totalorder %s24, 0
      %p113 = por %p111, %p112
      %p114 = scmp.ne.s32.totalorder %s100, %s101
      %p115 = scmp.eq.s32.totalorder %s25, 2
      %p116 = por %p114, %p115
      %p118 = scmp.ne.s32.totalorder %s101, %s117
      %p119 = scmp.eq.s32.totalorder %s25, 0
      %p120 = por %p118, %p119
      %s121 = ssub.s32 %s19, %s26
      %p122 = scmp.eq.s32.totalorder %s121, 0
      %s124 = sadd.s32 %s123, 1
      %s125 = scalar_select %p122, %s123, %s124
      %p128 = pneg %p122
      %p129 = scmp.eq.s32.totalorder %s19, 2
      %p130 = por %p128, %p129
      %p131 = scmp.ne.s32.totalorder %s123, %s126
      %p132 = scmp.eq.s32.totalorder %s19, 0
      %p133 = por %p131, %p132
      %p134 = scmp.ne.s32.totalorder %s123, %s126
      %p135 = scmp.eq.s32.totalorder %s24, 2
      %p136 = por %p134, %p135
      %p137 = scmp.ne.s32.totalorder %s126, %s127
      %p138 = scmp.eq.s32.totalorder %s24, 0
      %p139 = por %p137, %p138
      %p140 = scmp.ne.s32.totalorder %s126, %s127
      %p141 = scmp.eq.s32.totalorder %s25, 2
      %p142 = por %p140, %p141
      %p144 = scmp.ne.s32.totalorder %s127, %s143
      %p145 = scmp.eq.s32.totalorder %s25, 0
      %p146 = por %p144, %p145
      %s147 = ssub.s32 %s19, %s26
      %p148 = scmp.eq.s32.totalorder %s147, 0
      %s150 = sadd.s32 %s149, 1
      %s151 = scalar_select %p148, %s149, %s150
      %p154 = pneg %p148
      %p155 = scmp.eq.s32.totalorder %s19, 2
      %p156 = por %p154, %p155
      %p157 = scmp.ne.s32.totalorder %s149, %s152
      %p158 = scmp.eq.s32.totalorder %s19, 0
      %p159 = por %p157, %p158
      %p160 = scmp.ne.s32.totalorder %s149, %s152
      %p161 = scmp.eq.s32.totalorder %s24, 2
      %p162 = por %p160, %p161
      %p163 = scmp.ne.s32.totalorder %s152, %s153
      %p164 = scmp.eq.s32.totalorder %s24, 0
      %p165 = por %p163, %p164
      %p166 = scmp.ne.s32.totalorder %s152, %s153
      %p167 = scmp.eq.s32.totalorder %s25, 2
      %p168 = por %p166, %p167
      %p170 = scmp.ne.s32.totalorder %s153, %s169
      %p171 = scmp.eq.s32.totalorder %s25, 0
      %p172 = por %p170, %p171
      %s173 = ssub.s32 %s19, %s26
      %p174 = scmp.eq.s32.totalorder %s173, 0
      %s176 = sadd.s32 %s175, 1
      %s177 = scalar_select %p174, %s175, %s176
      %p180 = pneg %p174
      %p181 = scmp.eq.s32.totalorder %s19, 2
      %p182 = por %p180, %p181
      %p183 = scmp.ne.s32.totalorder %s175, %s178
      %p184 = scmp.eq.s32.totalorder %s19, 0
      %p185 = por %p183, %p184
      %p186 = scmp.ne.s32.totalorder %s175, %s178
      %p187 = scmp.eq.s32.totalorder %s24, 2
      %p188 = por %p186, %p187
      %p189 = scmp.ne.s32.totalorder %s178, %s179
      %p190 = scmp.eq.s32.totalorder %s24, 0
      %p191 = por %p189, %p190
      %p192 = scmp.ne.s32.totalorder %s178, %s179
      %p193 = scmp.eq.s32.totalorder %s25, 2
      %p194 = por %p192, %p193
      %p196 = scmp.ne.s32.totalorder %s179, %s195
      %p197 = scmp.eq.s32.totalorder %s25, 0
      %p198 = por %p196, %p197
      %p199 = scmp.le.s32.totalorder 1, %s19
      %p200 = scmp.lt.s32.totalorder %s19, 4
      %p201 = pnand %p199, %p200
      %p202 = pneg %p201
      // Predicated region
      $region9: #{triplet_network.1} parent=5 // pred_check
        _
      $region10: #{triplet_network.1} parent=5 // pred_check_branch
        %204 = sbr.rel (%p201) target = $region12
      $region11: #{triplet_network.1} parent=5 // pred_region
        %s205 = ssub.s32 %s19, 1
        // Predicated region
        $region13: #{triplet_network.1} parent=11 // pred_check
          %p206 = pneg %p66
        $region14: #{triplet_network.1} parent=11 // pred_check_branch
          %208 = sbr.rel (%p206) target = $region16
        $region15: #{triplet_network.1} parent=11 // pred_region
          _
        $region16: #{triplet_network.1} parent=11 // pred_fallthru
          _
        // Predicated region
        $region17: #{triplet_network.1} parent=11 // pred_check
          %p209 = pneg %p87
        $region18: #{triplet_network.1} parent=11 // pred_check_branch
          %211 = sbr.rel (%p209) target = $region20
        $region19: #{triplet_network.1} parent=11 // pred_region
          _
        $region20: #{triplet_network.1} parent=11 // pred_fallthru
          _
      $region12: #{triplet_network.1} parent=5 // pred_fallthru
        _
      %p212 = scmp.lt.s32.totalorder %s19, 3
      // Predicated region
      $region21: #{triplet_network.1} parent=5 // pred_check
        %p213 = pneg %p212
      $region22: #{triplet_network.1} parent=5 // pred_check_branch
        %215 = sbr.rel (%p213) target = $region24
      $region23: #{triplet_network.1} parent=5 // pred_region
        // Predicated region
        $region25: #{triplet_network.1} parent=23 // pred_check
          %p216 = pneg %p39
        $region26: #{triplet_network.1} parent=23 // pred_check_branch
          %218 = sbr.rel (%p216) target = $region28
        $region27: #{triplet_network.1} parent=23 // pred_region
          %s219 = smul.u32 16, %s19
          %s220 = ssub.s32 40, %s219
          %p221 = scmp.lt.s32.totalorder %s220, 16
          %s222 = scalar_select %p221, %s220, 16
          %s223 = smul.u32 128, %s222
          %p224 = scmp.lt.s32.totalorder %s219, 39
          %s225 = scalar_select %p224, %s219, 39
          %s226 = smul.addr %s225, 8
          %s227 = scalar_lea.vmem %s0, %s226
          %s228 = smul.u32 16, %s19
          %s229 = ssub.s32 40, %s228
          %p230 = scmp.lt.s32.totalorder %s229, 16
          %s231 = scalar_select %p230, %s229, 16
          %s232 = smul.u32 128, %s231
        $region28: #{triplet_network.1} parent=23 // pred_fallthru
          _
        // Predicated region
        $region29: #{triplet_network.1} parent=23 // pred_check
          %p233 = pneg %p107
        $region30: #{triplet_network.1} parent=23 // pred_check_branch
          %235 = sbr.rel (%p233) target = $region32
        $region31: #{triplet_network.1} parent=23 // pred_region
          %s236 = smul.u32 16, %s19
          %s237 = ssub.s32 40, %s236
          %p238 = scmp.lt.s32.totalorder %s237, 16
          %s239 = scalar_select %p238, %s237, 16
          %s240 = smul.u32 128, %s239
          %p241 = scmp.lt.s32.totalorder %s236, 39
          %s242 = scalar_select %p241, %s236, 39
          %s243 = smul.addr %s242, 8
          %s244 = scalar_lea.vmem %s3, %s243
          %s245 = smul.u32 16, %s19
          %s246 = ssub.s32 40, %s245
          %p247 = scmp.lt.s32.totalorder %s246, 16
          %s248 = scalar_select %p247, %s246, 16
          %s249 = smul.u32 128, %s248
        $region32: #{triplet_network.1} parent=23 // pred_fallthru
          _
        // Predicated region
        $region33: #{triplet_network.1} parent=23 // pred_check
          %p250 = pneg %p133
        $region34: #{triplet_network.1} parent=23 // pred_check_branch
          %252 = sbr.rel (%p250) target = $region36
        $region35: #{triplet_network.1} parent=23 // pred_region
          %s253 = sand.u32 %s123, 1
          %s254 = scalar_lea.sflag [#allocation3], %s253
          %s255 = sand.u32 %s123, 1
          %s256 = smul.addr %s255, 128
          %s257 = scalar_lea.vmem [#allocation2], %s256
          %s258 = smul.u32 16, %s19
          %s259 = ssub.s32 40, %s258
          %p260 = scmp.lt.s32.totalorder %s259, 16
          %s261 = scalar_select %p260, %s259, 16
          %s262 = smul.u32 128, %s261
          %s264 = ssub.s32 2048, %s262
          %265 = vsyncadd %s254, %s264
          %p266 = scmp.ne.s32.totalorder 0, %s262
          %s267 = smul.addr %s258, 128
          %s268 = scalar_lea.hbm %s4, %s267
          %s269 = smul.u32 8, %s261
          %s270 = sshll.u32 %s257, 4
          %s271 = int_to_ptr.vmem [resolvable:$true] %s270
          %s272 = sshll.u32 %s269, 4
          %276 = dma.hbm_to_vmem [thread:$0]  (%p266), %s268, %s272, %s271, %s254, 128, 128, 8
        $region36: #{triplet_network.1} parent=23 // pred_fallthru
          _
      $region24: #{triplet_network.1} parent=5 // pred_fallthru
        _
      %p277 = scmp.le.s32.totalorder 1, %s19
      %p278 = scmp.lt.s32.totalorder %s19, 4
      %p279 = pnand %p277, %p278
      %p280 = pneg %p279
      // Predicated region
      $region37: #{triplet_network.1} parent=5 // pred_check
        _
      $region38: #{triplet_network.1} parent=5 // pred_check_branch
        %282 = sbr.rel (%p279) target = $region40
      $region39: #{triplet_network.1} parent=5 // pred_region
        %s283 = ssub.s32 %s19, 1
        %s284 = sand.u32 %s126, 1
        %s285 = scalar_lea.sflag [#allocation3], %s284
        %s286 = sand.u32 %s126, 1
        %s287 = smul.addr %s286, 128
        %s288 = scalar_lea.vmem [#allocation2], %s287
        // Predicated region
        $region41: #{triplet_network.1} parent=39 // pred_check
          %p289 = pneg %p139
        $region42: #{triplet_network.1} parent=39 // pred_check_branch
          %291 = sbr.rel (%p289) target = $region44
        $region43: #{triplet_network.1} parent=39 // pred_region
          %292 = dma.done %s285, 2048
        $region44: #{triplet_network.1} parent=39 // pred_fallthru
          _
        %s293 = smul.u32 16, %s24
        %s294 = ssub.s32 40, %s293
        %p295 = scmp.lt.s32.totalorder %s294, 16
        %s296 = scalar_select %p295, %s294, 16
        %s297 = smul.u32 128, %s296
        %p298 = scmp.lt.s32.totalorder %s293, 39
        %s299 = scalar_select %p298, %s293, 39
        %s300 = smul.addr %s299, 8
        %s301 = scalar_lea.vmem %s0, %s300
        %p302 = pneg %p45
        %p303 = pneg %p42
        %p304 = pneg %p66
        %p305 = pneg %p63
        %p306 = pneg %p87
        %p307 = pneg %p84
        %s308 = smul.u32 16, %s24
        %s309 = ssub.s32 40, %s308
        %p310 = scmp.lt.s32.totalorder %s309, 16
        %s311 = scalar_select %p310, %s309, 16
        %s312 = smul.u32 128, %s311
        %p313 = scmp.lt.s32.totalorder %s308, 39
        %s314 = scalar_select %p313, %s308, 39
        %s315 = smul.addr %s314, 8
        %s316 = scalar_lea.vmem %s3, %s315
        %p317 = pneg %p113
        %p318 = pneg %p110
        %s319 = sand.u32 %s126, 1
        %s320 = scalar_lea.sflag [#allocation3], %s319
        %s321 = sand.u32 %s126, 1
        %s322 = smul.addr %s321, 128
        %s323 = scalar_lea.vmem [#allocation2], %s322
        %p324 = pneg %p139
        %p325 = pneg %p136
        %p326 = pneg %p165
        %p327 = pneg %p162
        %s328 = sand.u32 %s152, 1
        %s329 = scalar_lea.sflag [#allocation4], %s328
        %s330 = sand.u32 %s152, 1
        %s331 = smul.addr %s330, 128
        %s332 = scalar_lea.vmem [#allocation5], %s331
        %p333 = pneg %p191
        %p334 = pneg %p188
        %p335 = scmp.lt.s32.totalorder %s24, 2
        %s336 = scalar_select %p335, %s24, 2
        %s337 = smul.addr %s336, 2
        %s338 = scalar_lea.vmem %s6, %s337
        %s339 = smul.u32 16, %s24
        %s340 = ssub.s32 40, %s339
        %p341 = scmp.lt.s32.totalorder %s340, 16
        %s342 = scalar_select %p341, %s340, 16
        %s343 = smul.u32 128, %s342
        %p344 = scmp.lt.s32.totalorder %s339, 39
        %s345 = scalar_select %p344, %s339, 39
        %s346 = smul.addr %s345, 8
        %s347 = scalar_lea.vmem %s0, %s346
        %s348 = smul.u32 16, %s24
        %s349 = ssub.s32 40, %s348
        %p350 = scmp.lt.s32.totalorder %s349, 16
        %s351 = scalar_select %p350, %s349, 16
        %s352 = smul.u32 128, %s351
        %s353 = smul.u32 16, %s24
        %s354 = ssub.s32 40, %s353
        %p355 = scmp.lt.s32.totalorder %s354, 16
        %s356 = scalar_select %p355, %s354, 16
        %s357 = smul.u32 128, %s356
        %p358 = scmp.lt.s32.totalorder %s353, 39
        %s359 = scalar_select %p358, %s353, 39
        %s360 = smul.addr %s359, 8
        %s361 = scalar_lea.vmem %s3, %s360
        %s362 = smul.u32 16, %s24
        %s363 = ssub.s32 40, %s362
        %p364 = scmp.lt.s32.totalorder %s363, 16
        %s365 = scalar_select %p364, %s363, 16
        %s366 = smul.u32 128, %s365
        %s367 = smul.u32 16, %s24
        %s368 = ssub.s32 40, %s367
        %p369 = scmp.lt.s32.totalorder %s368, 16
        %s370 = scalar_select %p369, %s368, 16
        %s371 = smul.u32 128, %s370
        %s372 = smul.u32 16, %s24
        %s373 = ssub.s32 40, %s372
        %p374 = scmp.lt.s32.totalorder %s373, 16
        %s375 = scalar_select %p374, %s373, 16
        %s376 = smul.u32 128, %s375
        %p377 = scmp.lt.s32.totalorder %s24, 2
        %s378 = scalar_select %p377, %s24, 2
        %s379 = smul.addr %s378, 2
        %s380 = scalar_lea.vmem %s6, %s379
        %v381 = vld [vmem:[%s347] sm:$0xff]
        %v382 = vld [vmem:[%s347 + $0x8] sm:$0xff]
        %v383 = vld [vmem:[%s347 + $0x10] sm:$0xff]
        %v384 = vld [vmem:[%s347 + $0x18] sm:$0xff]
        %v385 = vld [vmem:[%s347 + $0x20] sm:$0xff]
        %v386 = vld [vmem:[%s347 + $0x28] sm:$0xff]
        %v387 = vld [vmem:[%s347 + $0x30] sm:$0xff]
        %v388 = vld [vmem:[%s347 + $0x38] sm:$0xff]
        %v389 = vld [vmem:[%s347 + $0x40] sm:$0xff]
        %v390 = vld [vmem:[%s347 + $0x48] sm:$0xff]
        %v391 = vld [vmem:[%s347 + $0x50] sm:$0xff]
        %v392 = vld [vmem:[%s347 + $0x58] sm:$0xff]
        %v393 = vld [vmem:[%s347 + $0x60] sm:$0xff]
        %v394 = vld [vmem:[%s347 + $0x68] sm:$0xff]
        %v395 = vld [vmem:[%s347 + $0x70] sm:$0xff]
        %v396 = vld [vmem:[%s347 + $0x78] sm:$0xff]
        %v397 = vld [vmem:[%s1] sm:$0xff]
        %v398 = vld [vmem:[%s1 + $0x8] sm:$0xff]
        %v399 = vld [vmem:[%s1 + $0x10] sm:$0xff]
        %v400 = vld [vmem:[%s1 + $0x18] sm:$0xff]
        %v401 = vld [vmem:[%s2] sm:$0x1]
        %v403 = vlaneseq
        %v404 = vshrl.u32 %v403, 7
        %v405 = vsub.s32 0, %v404
        %v406 = vrot.slane %v401, %v405
        %vm408 = vcmask 261120
        %v410 = vsel %vm408, %v381, 0
        %v413 = vsel %vm408, %v382, 0
        %v416 = vsel %vm408, %v383, 0
        %v419 = vsel %vm408, %v384, 0
        %v422 = vsel %vm408, %v385, 0
        %v425 = vsel %vm408, %v386, 0
        %v428 = vsel %vm408, %v387, 0
        %v431 = vsel %vm408, %v388, 0
        %v434 = vsel %vm408, %v389, 0
        %v437 = vsel %vm408, %v390, 0
        %v440 = vsel %vm408, %v391, 0
        %v443 = vsel %vm408, %v392, 0
        %v446 = vsel %vm408, %v393, 0
        %v449 = vsel %vm408, %v394, 0
        %v452 = vsel %vm408, %v395, 0
        %v455 = vsel %vm408, %v396, 0
        %457 = vmatprep.subr.mxu0 0.0
        %458 = vmatpush1.msra.mxu0 %v397
        %459 = vmatprep.subr.mxu0 0.0
        %460 = vmatpush1.msra.mxu0 %v398
        %461 = vmatprep.subr.mxu0 0.0
        %462 = vmatpush1.msra.mxu0 %v399
        %463 = vmatprep.subr.mxu0 0.0
        %464 = vmatpush1.msra.mxu0 %v400
        %465 = vmatprep.subr.mxu0 0.0
        %466 = vmatpush1.msra.mxu0 0.0
        %467 = vmatprep.subr.mxu0 0.0
        %468 = vmatpush1.msra.mxu0 0.0
        %469 = vmatprep.subr.mxu0 0.0
        %470 = vmatpush1.msra.mxu0 0.0
        %471 = vmatprep.subr.mxu0 0.0
        %472 = vmatpush1.msra.mxu0 0.0
        %473 = vmatprep.subr.mxu0 0.0
        %474 = vmatpush1.msra.mxu0 0.0
        %475 = vmatprep.subr.mxu0 0.0
        %476 = vmatpush1.msra.mxu0 0.0
        %477 = vmatprep.subr.mxu0 0.0
        %478 = vmatpush1.msra.mxu0 0.0
        %479 = vmatprep.subr.mxu0 0.0
        %480 = vmatpush1.msra.mxu0 0.0
        %481 = vmatprep.subr.mxu0 0.0
        %482 = vmatpush1.msra.mxu0 0.0
        %483 = vmatprep.subr.mxu0 0.0
        %484 = vmatpush1.msra.mxu0 0.0
        %485 = vmatprep.subr.mxu0 0.0
        %486 = vmatpush1.msra.mxu0 0.0
        %487 = vmatprep.subr.mxu0 0.0
        %488 = vmatpush1.msra.mxu0 0.0
        %489 = vmatprep.subr.mxu0 0.0
        %490 = vmatpush1.msra.mxu0 0.0
        %491 = vmatprep.subr.mxu0 0.0
        %492 = vmatpush1.msra.mxu0 0.0
        %493 = vmatprep.subr.mxu0 0.0
        %494 = vmatpush1.msra.mxu0 0.0
        %495 = vmatprep.subr.mxu0 0.0
        %496 = vmatpush1.msra.mxu0 0.0
        %497 = vmatprep.subr.mxu0 0.0
        %498 = vmatpush1.msra.mxu0 0.0
        %499 = vmatprep.subr.mxu0 0.0
        %500 = vmatpush1.msra.mxu0 0.0
        %501 = vmatprep.subr.mxu0 0.0
        %502 = vmatpush1.msra.mxu0 0.0
        %503 = vmatprep.subr.mxu0 0.0
        %504 = vmatpush1.msra.mxu0 0.0
        %505 = vmatprep.subr.mxu0 0.0
        %506 = vmatpush1.msra.mxu0 0.0
        %507 = vmatprep.subr.mxu0 0.0
        %508 = vmatpush1.msra.mxu0 0.0
        %509 = vmatprep.subr.mxu0 0.0
        %510 = vmatpush1.msra.mxu0 0.0
        %511 = vmatprep.subr.mxu0 0.0
        %512 = vmatpush1.msra.mxu0 0.0
        %513 = vmatprep.subr.mxu0 0.0
        %514 = vmatpush1.msra.mxu0 0.0
        %515 = vmatprep.subr.mxu0 0.0
        %516 = vmatpush1.msra.mxu0 0.0
        %517 = vmatprep.subr.mxu0 0.0
        %518 = vmatpush1.msra.mxu0 0.0
        %519 = vmatprep.subr.mxu0 0.0
        %520 = vmatpush1.msra.mxu0 0.0
        %521 = vmatprep.mubr.f32.mxu0 0.0
        %522 = vmatmul.mubr.f32.gmra.mrb[0].mxu0 %v410
        %v523 = vpop.f32.mrb[0].mxu0
        %v524 = vadd.f32 %v406, %v523
        %v525 = vpop.f32.mrb[0].mxu0
        %526 = vmatprep.mubr.f32.mxu0 0.0
        %527 = vmatmul.mubr.f32.gmra.mrb[0].mxu0 %v413
        %v528 = vpop.f32.mrb[0].mxu0
        %v529 = vadd.f32 %v406, %v528
        %v530 = vpop.f32.mrb[0].mxu0
        %531 = vmatprep.mubr.f32.mxu0 0.0
        %532 = vmatmul.mubr.f32.gmra.mrb[0].mxu0 %v416
        %v533 = vpop.f32.mrb[0].mxu0
        %v534 = vadd.f32 %v406, %v533
        %v535 = vpop.f32.mrb[0].mxu0
        %536 = vmatprep.mubr.f32.mxu0 0.0
        %537 = vmatmul.mubr.f32.gmra.mrb[0].mxu0 %v419
        %v538 = vpop.f32.mrb[0].mxu0
        %v539 = vadd.f32 %v406, %v538
        %v540 = vpop.f32.mrb[0].mxu0
        %541 = vmatprep.mubr.f32.mxu0 0.0
        %542 = vmatmul.mubr.f32.gmra.mrb[0].mxu0 %v422
        %v543 = vpop.f32.mrb[0].mxu0
        %v544 = vadd.f32 %v406, %v543
        %v545 = vpop.f32.mrb[0].mxu0
        %546 = vmatprep.mubr.f32.mxu0 0.0
        %547 = vmatmul.mubr.f32.gmra.mrb[0].mxu0 %v425
        %v548 = vpop.f32.mrb[0].mxu0
        %v549 = vadd.f32 %v406, %v548
        %v550 = vpop.f32.mrb[0].mxu0
        %551 = vmatprep.mubr.f32.mxu0 0.0
        %552 = vmatmul.mubr.f32.gmra.mrb[0].mxu0 %v428
        %v553 = vpop.f32.mrb[0].mxu0
        %v554 = vadd.f32 %v406, %v553
        %v555 = vpop.f32.mrb[0].mxu0
        %556 = vmatprep.mubr.f32.mxu0 0.0
        %557 = vmatmul.mubr.f32.gmra.mrb[0].mxu0 %v431
        %v558 = vpop.f32.mrb[0].mxu0
        %v559 = vadd.f32 %v406, %v558
        %v560 = vpop.f32.mrb[0].mxu0
        %561 = vmatprep.mubr.f32.mxu0 0.0
        %562 = vmatmul.mubr.f32.gmra.mrb[0].mxu0 %v434
        %v563 = vpop.f32.mrb[0].mxu0
        %v564 = vadd.f32 %v406, %v563
        %v565 = vpop.f32.mrb[0].mxu0
        %566 = vmatprep.mubr.f32.mxu0 0.0
        %567 = vmatmul.mubr.f32.gmra.mrb[0].mxu0 %v437
        %v568 = vpop.f32.mrb[0].mxu0
        %v569 = vadd.f32 %v406, %v568
        %v570 = vpop.f32.mrb[0].mxu0
        %571 = vmatprep.mubr.f32.mxu0 0.0
        %572 = vmatmul.mubr.f32.gmra.mrb[0].mxu0 %v440
        %v573 = vpop.f32.mrb[0].mxu0
        %v574 = vadd.f32 %v406, %v573
        %v575 = vpop.f32.mrb[0].mxu0
        %576 = vmatprep.mubr.f32.mxu0 0.0
        %577 = vmatmul.mubr.f32.gmra.mrb[0].mxu0 %v443
        %v578 = vpop.f32.mrb[0].mxu0
        %v579 = vadd.f32 %v406, %v578
        %v580 = vpop.f32.mrb[0].mxu0
        %581 = vmatprep.mubr.f32.mxu0 0.0
        %582 = vmatmul.mubr.f32.gmra.mrb[0].mxu0 %v446
        %v583 = vpop.f32.mrb[0].mxu0
        %v584 = vadd.f32 %v406, %v583
        %v585 = vpop.f32.mrb[0].mxu0
        %586 = vmatprep.mubr.f32.mxu0 0.0
        %587 = vmatmul.mubr.f32.gmra.mrb[0].mxu0 %v449
        %v588 = vpop.f32.mrb[0].mxu0
        %v589 = vadd.f32 %v406, %v588
        %v590 = vpop.f32.mrb[0].mxu0
        %591 = vmatprep.mubr.f32.mxu0 0.0
        %592 = vmatmul.mubr.f32.gmra.mrb[0].mxu0 %v452
        %v593 = vpop.f32.mrb[0].mxu0
        %v594 = vadd.f32 %v406, %v593
        %v595 = vpop.f32.mrb[0].mxu0
        %596 = vmatprep.mubr.f32.mxu0 0.0
        %597 = vmatmul.mubr.f32.gmra.mrb[0].mxu0 %v455
        %v598 = vpop.f32.mrb[0].mxu0
        %v599 = vadd.f32 %v406, %v598
        %v600 = vpop.f32.mrb[0].mxu0
        %601 = vdwg.mxu0
        %602 = vst [vmem:[%s332] sm:$0xff] %v524
        %603 = vst [vmem:[%s332 + $0x8] sm:$0xff] %v529
        %604 = vst [vmem:[%s332 + $0x10] sm:$0xff] %v534
        %605 = vst [vmem:[%s332 + $0x18] sm:$0xff] %v539
        %606 = vst [vmem:[%s332 + $0x20] sm:$0xff] %v544
        %607 = vst [vmem:[%s332 + $0x28] sm:$0xff] %v549
        %608 = vst [vmem:[%s332 + $0x30] sm:$0xff] %v554
        %609 = vst [vmem:[%s332 + $0x38] sm:$0xff] %v559
        %610 = vst [vmem:[%s332 + $0x40] sm:$0xff] %v564
        %611 = vst [vmem:[%s332 + $0x48] sm:$0xff] %v569
        %612 = vst [vmem:[%s332 + $0x50] sm:$0xff] %v574
        %613 = vst [vmem:[%s332 + $0x58] sm:$0xff] %v579
        %614 = vst [vmem:[%s332 + $0x60] sm:$0xff] %v584
        %615 = vst [vmem:[%s332 + $0x68] sm:$0xff] %v589
        %616 = vst [vmem:[%s332 + $0x70] sm:$0xff] %v594
        %617 = vst [vmem:[%s332 + $0x78] sm:$0xff] %v599
        %v618 = vld [vmem:[%s361] sm:$0xff]
        %v619 = vld [vmem:[%s361 + $0x8] sm:$0xff]
        %v620 = vld [vmem:[%s361 + $0x10] sm:$0xff]
        %v621 = vld [vmem:[%s361 + $0x18] sm:$0xff]
        %v622 = vld [vmem:[%s361 + $0x20] sm:$0xff]
        %v623 = vld [vmem:[%s361 + $0x28] sm:$0xff]
        %v624 = vld [vmem:[%s361 + $0x30] sm:$0xff]
        %v625 = vld [vmem:[%s361 + $0x38] sm:$0xff]
        %v626 = vld [vmem:[%s361 + $0x40] sm:$0xff]
        %v627 = vld [vmem:[%s361 + $0x48] sm:$0xff]
        %v628 = vld [vmem:[%s361 + $0x50] sm:$0xff]
        %v629 = vld [vmem:[%s361 + $0x58] sm:$0xff]
        %v630 = vld [vmem:[%s361 + $0x60] sm:$0xff]
        %v631 = vld [vmem:[%s361 + $0x68] sm:$0xff]
        %v632 = vld [vmem:[%s361 + $0x70] sm:$0xff]
        %v633 = vld [vmem:[%s361 + $0x78] sm:$0xff]
        %v634 = vsub.f32 %v524, %v618
        %v635 = vsub.f32 %v529, %v619
        %v636 = vsub.f32 %v534, %v620
        %v637 = vsub.f32 %v539, %v621
        %v638 = vsub.f32 %v544, %v622
        %v639 = vsub.f32 %v549, %v623
        %v640 = vsub.f32 %v554, %v624
        %v641 = vsub.f32 %v559, %v625
        %v642 = vsub.f32 %v564, %v626
        %v643 = vsub.f32 %v569, %v627
        %v644 = vsub.f32 %v574, %v628
        %v645 = vsub.f32 %v579, %v629
        %v646 = vsub.f32 %v584, %v630
        %v647 = vsub.f32 %v589, %v631
        %v648 = vsub.f32 %v594, %v632
        %v649 = vsub.f32 %v599, %v633
        %v650 = vadd.f32 %v634, 1e-06
        %v651 = vadd.f32 %v635, 1e-06
        %v652 = vadd.f32 %v636, 1e-06
        %v653 = vadd.f32 %v637, 1e-06
        %v654 = vadd.f32 %v638, 1e-06
        %v655 = vadd.f32 %v639, 1e-06
        %v656 = vadd.f32 %v640, 1e-06
        %v657 = vadd.f32 %v641, 1e-06
        %v658 = vadd.f32 %v642, 1e-06
        %v659 = vadd.f32 %v643, 1e-06
        %v660 = vadd.f32 %v644, 1e-06
        %v661 = vadd.f32 %v645, 1e-06
        %v662 = vadd.f32 %v646, 1e-06
        %v663 = vadd.f32 %v647, 1e-06
        %v664 = vadd.f32 %v648, 1e-06
        %v665 = vadd.f32 %v649, 1e-06
        %v666 = vld [vmem:[%s288] sm:$0xff]
        %v667 = vld [vmem:[%s288 + $0x8] sm:$0xff]
        %v668 = vld [vmem:[%s288 + $0x10] sm:$0xff]
        %v669 = vld [vmem:[%s288 + $0x18] sm:$0xff]
        %v670 = vld [vmem:[%s288 + $0x20] sm:$0xff]
        %v671 = vld [vmem:[%s288 + $0x28] sm:$0xff]
        %v672 = vld [vmem:[%s288 + $0x30] sm:$0xff]
        %v673 = vld [vmem:[%s288 + $0x38] sm:$0xff]
        %v674 = vld [vmem:[%s288 + $0x40] sm:$0xff]
        %v675 = vld [vmem:[%s288 + $0x48] sm:$0xff]
        %v676 = vld [vmem:[%s288 + $0x50] sm:$0xff]
        %v677 = vld [vmem:[%s288 + $0x58] sm:$0xff]
        %v678 = vld [vmem:[%s288 + $0x60] sm:$0xff]
        %v679 = vld [vmem:[%s288 + $0x68] sm:$0xff]
        %v680 = vld [vmem:[%s288 + $0x70] sm:$0xff]
        %v681 = vld [vmem:[%s288 + $0x78] sm:$0xff]
        %v682 = vsub.f32 %v524, %v666
        %v683 = vsub.f32 %v529, %v667
        %v684 = vsub.f32 %v534, %v668
        %v685 = vsub.f32 %v539, %v669
        %v686 = vsub.f32 %v544, %v670
        %v687 = vsub.f32 %v549, %v671
        %v688 = vsub.f32 %v554, %v672
        %v689 = vsub.f32 %v559, %v673
        %v690 = vsub.f32 %v564, %v674
        %v691 = vsub.f32 %v569, %v675
        %v692 = vsub.f32 %v574, %v676
        %v693 = vsub.f32 %v579, %v677
        %v694 = vsub.f32 %v584, %v678
        %v695 = vsub.f32 %v589, %v679
        %v696 = vsub.f32 %v594, %v680
        %v697 = vsub.f32 %v599, %v681
        %v698 = vadd.f32 %v682, 1e-06
        %v699 = vadd.f32 %v683, 1e-06
        %v700 = vadd.f32 %v684, 1e-06
        %v701 = vadd.f32 %v685, 1e-06
        %v702 = vadd.f32 %v686, 1e-06
        %v703 = vadd.f32 %v687, 1e-06
        %v704 = vadd.f32 %v688, 1e-06
        %v705 = vadd.f32 %v689, 1e-06
        %v706 = vadd.f32 %v690, 1e-06
        %v707 = vadd.f32 %v691, 1e-06
        %v708 = vadd.f32 %v692, 1e-06
        %v709 = vadd.f32 %v693, 1e-06
        %v710 = vadd.f32 %v694, 1e-06
        %v711 = vadd.f32 %v695, 1e-06
        %v712 = vadd.f32 %v696, 1e-06
        %v713 = vadd.f32 %v697, 1e-06
        %v714 = vmul.f32 %v650, %v650
        %v715 = vmul.f32 %v651, %v651
        %v716 = vmul.f32 %v652, %v652
        %v717 = vmul.f32 %v653, %v653
        %v718 = vmul.f32 %v654, %v654
        %v719 = vmul.f32 %v655, %v655
        %v720 = vmul.f32 %v656, %v656
        %v721 = vmul.f32 %v657, %v657
        %v722 = vmul.f32 %v658, %v658
        %v723 = vmul.f32 %v659, %v659
        %v724 = vmul.f32 %v660, %v660
        %v725 = vmul.f32 %v661, %v661
        %v726 = vmul.f32 %v662, %v662
        %v727 = vmul.f32 %v663, %v663
        %v728 = vmul.f32 %v664, %v664
        %v729 = vmul.f32 %v665, %v665
        %730 = vadd.xlane.f32.xlu0 %v714
        %v731 = vpop.xlane.xlu0 %730
        %732 = vadd.xlane.f32.xlu0 %v715
        %v733 = vpop.xlane.xlu0 %732
        %734 = vadd.xlane.f32.xlu0 %v716
        %v735 = vpop.xlane.xlu0 %734
        %736 = vadd.xlane.f32.xlu0 %v717
        %v737 = vpop.xlane.xlu0 %736
        %738 = vadd.xlane.f32.xlu0 %v718
        %v739 = vpop.xlane.xlu0 %738
        %740 = vadd.xlane.f32.xlu0 %v719
        %v741 = vpop.xlane.xlu0 %740
        %742 = vadd.xlane.f32.xlu0 %v720
        %v743 = vpop.xlane.xlu0 %742
        %744 = vadd.xlane.f32.xlu0 %v721
        %v745 = vpop.xlane.xlu0 %744
        %746 = vadd.xlane.f32.xlu0 %v722
        %v747 = vpop.xlane.xlu0 %746
        %748 = vadd.xlane.f32.xlu0 %v723
        %v749 = vpop.xlane.xlu0 %748
        %750 = vadd.xlane.f32.xlu0 %v724
        %v751 = vpop.xlane.xlu0 %750
        %752 = vadd.xlane.f32.xlu0 %v725
        %v753 = vpop.xlane.xlu0 %752
        %754 = vadd.xlane.f32.xlu0 %v726
        %v755 = vpop.xlane.xlu0 %754
        %756 = vadd.xlane.f32.xlu0 %v727
        %v757 = vpop.xlane.xlu0 %756
        %758 = vadd.xlane.f32.xlu0 %v728
        %v759 = vpop.xlane.xlu0 %758
        %760 = vadd.xlane.f32.xlu0 %v729
        %v761 = vpop.xlane.xlu0 %760
        %v762 = vrsqrt.pop %v731
        %v763 = vmul.f32 %v731, %v762
        %vm764 = vcmp.eq.f32.partialorder %v731, inf
        %v765 = vsel %vm764, %v731, %v763
        %vm766 = vcmp.eq.f32.partialorder %v731, 0.0
        %v767 = vand.u32 %v731, 2147483648
        %v768 = vsel %vm766, %v767, %v765
        %v769 = vrsqrt.pop %v733
        %v770 = vmul.f32 %v733, %v769
        %vm771 = vcmp.eq.f32.partialorder %v733, inf
        %v772 = vsel %vm771, %v733, %v770
        %vm773 = vcmp.eq.f32.partialorder %v733, 0.0
        %v774 = vand.u32 %v733, 2147483648
        %v775 = vsel %vm773, %v774, %v772
        %v776 = vrsqrt.pop %v735
        %v777 = vmul.f32 %v735, %v776
        %vm778 = vcmp.eq.f32.partialorder %v735, inf
        %v779 = vsel %vm778, %v735, %v777
        %vm780 = vcmp.eq.f32.partialorder %v735, 0.0
        %v781 = vand.u32 %v735, 2147483648
        %v782 = vsel %vm780, %v781, %v779
        %v783 = vrsqrt.pop %v737
        %v784 = vmul.f32 %v737, %v783
        %vm785 = vcmp.eq.f32.partialorder %v737, inf
        %v786 = vsel %vm785, %v737, %v784
        %vm787 = vcmp.eq.f32.partialorder %v737, 0.0
        %v788 = vand.u32 %v737, 2147483648
        %v789 = vsel %vm787, %v788, %v786
        %v790 = vrsqrt.pop %v739
        %v791 = vmul.f32 %v739, %v790
        %vm792 = vcmp.eq.f32.partialorder %v739, inf
        %v793 = vsel %vm792, %v739, %v791
        %vm794 = vcmp.eq.f32.partialorder %v739, 0.0
        %v795 = vand.u32 %v739, 2147483648
        %v796 = vsel %vm794, %v795, %v793
        %v797 = vrsqrt.pop %v741
        %v798 = vmul.f32 %v741, %v797
        %vm799 = vcmp.eq.f32.partialorder %v741, inf
        %v800 = vsel %vm799, %v741, %v798
        %vm801 = vcmp.eq.f32.partialorder %v741, 0.0
        %v802 = vand.u32 %v741, 2147483648
        %v803 = vsel %vm801, %v802, %v800
        %v804 = vrsqrt.pop %v743
        %v805 = vmul.f32 %v743, %v804
        %vm806 = vcmp.eq.f32.partialorder %v743, inf
        %v807 = vsel %vm806, %v743, %v805
        %vm808 = vcmp.eq.f32.partialorder %v743, 0.0
        %v809 = vand.u32 %v743, 2147483648
        %v810 = vsel %vm808, %v809, %v807
        %v811 = vrsqrt.pop %v745
        %v812 = vmul.f32 %v745, %v811
        %vm813 = vcmp.eq.f32.partialorder %v745, inf
        %v814 = vsel %vm813, %v745, %v812
        %vm815 = vcmp.eq.f32.partialorder %v745, 0.0
        %v816 = vand.u32 %v745, 2147483648
        %v817 = vsel %vm815, %v816, %v814
        %v818 = vrsqrt.pop %v747
        %v819 = vmul.f32 %v747, %v818
        %vm820 = vcmp.eq.f32.partialorder %v747, inf
        %v821 = vsel %vm820, %v747, %v819
        %vm822 = vcmp.eq.f32.partialorder %v747, 0.0
        %v823 = vand.u32 %v747, 2147483648
        %v824 = vsel %vm822, %v823, %v821
        %v825 = vrsqrt.pop %v749
        %v826 = vmul.f32 %v749, %v825
        %vm827 = vcmp.eq.f32.partialorder %v749, inf
        %v828 = vsel %vm827, %v749, %v826
        %vm829 = vcmp.eq.f32.partialorder %v749, 0.0
        %v830 = vand.u32 %v749, 2147483648
        %v831 = vsel %vm829, %v830, %v828
        %v832 = vrsqrt.pop %v751
        %v833 = vmul.f32 %v751, %v832
        %vm834 = vcmp.eq.f32.partialorder %v751, inf
        %v835 = vsel %vm834, %v751, %v833
        %vm836 = vcmp.eq.f32.partialorder %v751, 0.0
        %v837 = vand.u32 %v751, 2147483648
        %v838 = vsel %vm836, %v837, %v835
        %v839 = vrsqrt.pop %v753
        %v840 = vmul.f32 %v753, %v839
        %vm841 = vcmp.eq.f32.partialorder %v753, inf
        %v842 = vsel %vm841, %v753, %v840
        %vm843 = vcmp.eq.f32.partialorder %v753, 0.0
        %v844 = vand.u32 %v753, 2147483648
        %v845 = vsel %vm843, %v844, %v842
        %v846 = vrsqrt.pop %v755
        %v847 = vmul.f32 %v755, %v846
        %vm848 = vcmp.eq.f32.partialorder %v755, inf
        %v849 = vsel %vm848, %v755, %v847
        %vm850 = vcmp.eq.f32.partialorder %v755, 0.0
        %v851 = vand.u32 %v755, 2147483648
        %v852 = vsel %vm850, %v851, %v849
        %v853 = vrsqrt.pop %v757
        %v854 = vmul.f32 %v757, %v853
        %vm855 = vcmp.eq.f32.partialorder %v757, inf
        %v856 = vsel %vm855, %v757, %v854
        %vm857 = vcmp.eq.f32.partialorder %v757, 0.0
        %v858 = vand.u32 %v757, 2147483648
        %v859 = vsel %vm857, %v858, %v856
        %v860 = vrsqrt.pop %v759
        %v861 = vmul.f32 %v759, %v860
        %vm862 = vcmp.eq.f32.partialorder %v759, inf
        %v863 = vsel %vm862, %v759, %v861
        %vm864 = vcmp.eq.f32.partialorder %v759, 0.0
        %v865 = vand.u32 %v759, 2147483648
        %v866 = vsel %vm864, %v865, %v863
        %v867 = vrsqrt.pop %v761
        %v868 = vmul.f32 %v761, %v867
        %vm869 = vcmp.eq.f32.partialorder %v761, inf
        %v870 = vsel %vm869, %v761, %v868
        %vm871 = vcmp.eq.f32.partialorder %v761, 0.0
        %v872 = vand.u32 %v761, 2147483648
        %v873 = vsel %vm871, %v872, %v870
        %v874 = vmul.f32 %v698, %v698
        %v875 = vmul.f32 %v699, %v699
        %v876 = vmul.f32 %v700, %v700
        %v877 = vmul.f32 %v701, %v701
        %v878 = vmul.f32 %v702, %v702
        %v879 = vmul.f32 %v703, %v703
        %v880 = vmul.f32 %v704, %v704
        %v881 = vmul.f32 %v705, %v705
        %v882 = vmul.f32 %v706, %v706
        %v883 = vmul.f32 %v707, %v707
        %v884 = vmul.f32 %v708, %v708
        %v885 = vmul.f32 %v709, %v709
        %v886 = vmul.f32 %v710, %v710
        %v887 = vmul.f32 %v711, %v711
        %v888 = vmul.f32 %v712, %v712
        %v889 = vmul.f32 %v713, %v713
        %890 = vadd.xlane.f32.xlu0 %v874
        %v891 = vpop.xlane.xlu0 %890
        %892 = vadd.xlane.f32.xlu0 %v875
        %v893 = vpop.xlane.xlu0 %892
        %894 = vadd.xlane.f32.xlu0 %v876
        %v895 = vpop.xlane.xlu0 %894
        %896 = vadd.xlane.f32.xlu0 %v877
        %v897 = vpop.xlane.xlu0 %896
        %898 = vadd.xlane.f32.xlu0 %v878
        %v899 = vpop.xlane.xlu0 %898
        %900 = vadd.xlane.f32.xlu0 %v879
        %v901 = vpop.xlane.xlu0 %900
        %902 = vadd.xlane.f32.xlu0 %v880
        %v903 = vpop.xlane.xlu0 %902
        %904 = vadd.xlane.f32.xlu0 %v881
        %v905 = vpop.xlane.xlu0 %904
        %906 = vadd.xlane.f32.xlu0 %v882
        %v907 = vpop.xlane.xlu0 %906
        %908 = vadd.xlane.f32.xlu0 %v883
        %v909 = vpop.xlane.xlu0 %908
        %910 = vadd.xlane.f32.xlu0 %v884
        %v911 = vpop.xlane.xlu0 %910
        %912 = vadd.xlane.f32.xlu0 %v885
        %v913 = vpop.xlane.xlu0 %912
        %914 = vadd.xlane.f32.xlu0 %v886
        %v915 = vpop.xlane.xlu0 %914
        %916 = vadd.xlane.f32.xlu0 %v887
        %v917 = vpop.xlane.xlu0 %916
        %918 = vadd.xlane.f32.xlu0 %v888
        %v919 = vpop.xlane.xlu0 %918
        %920 = vadd.xlane.f32.xlu0 %v889
        %v921 = vpop.xlane.xlu0 %920
        %v922 = vrsqrt.pop %v891
        %v923 = vmul.f32 %v891, %v922
        %vm924 = vcmp.eq.f32.partialorder %v891, inf
        %v925 = vsel %vm924, %v891, %v923
        %vm926 = vcmp.eq.f32.partialorder %v891, 0.0
        %v927 = vand.u32 %v891, 2147483648
        %v928 = vsel %vm926, %v927, %v925
        %v929 = vrsqrt.pop %v893
        %v930 = vmul.f32 %v893, %v929
        %vm931 = vcmp.eq.f32.partialorder %v893, inf
        %v932 = vsel %vm931, %v893, %v930
        %vm933 = vcmp.eq.f32.partialorder %v893, 0.0
        %v934 = vand.u32 %v893, 2147483648
        %v935 = vsel %vm933, %v934, %v932
        %v936 = vrsqrt.pop %v895
        %v937 = vmul.f32 %v895, %v936
        %vm938 = vcmp.eq.f32.partialorder %v895, inf
        %v939 = vsel %vm938, %v895, %v937
        %vm940 = vcmp.eq.f32.partialorder %v895, 0.0
        %v941 = vand.u32 %v895, 2147483648
        %v942 = vsel %vm940, %v941, %v939
        %v943 = vrsqrt.pop %v897
        %v944 = vmul.f32 %v897, %v943
        %vm945 = vcmp.eq.f32.partialorder %v897, inf
        %v946 = vsel %vm945, %v897, %v944
        %vm947 = vcmp.eq.f32.partialorder %v897, 0.0
        %v948 = vand.u32 %v897, 2147483648
        %v949 = vsel %vm947, %v948, %v946
        %v950 = vrsqrt.pop %v899
        %v951 = vmul.f32 %v899, %v950
        %vm952 = vcmp.eq.f32.partialorder %v899, inf
        %v953 = vsel %vm952, %v899, %v951
        %vm954 = vcmp.eq.f32.partialorder %v899, 0.0
        %v955 = vand.u32 %v899, 2147483648
        %v956 = vsel %vm954, %v955, %v953
        %v957 = vrsqrt.pop %v901
        %v958 = vmul.f32 %v901, %v957
        %vm959 = vcmp.eq.f32.partialorder %v901, inf
        %v960 = vsel %vm959, %v901, %v958
        %vm961 = vcmp.eq.f32.partialorder %v901, 0.0
        %v962 = vand.u32 %v901, 2147483648
        %v963 = vsel %vm961, %v962, %v960
        %v964 = vrsqrt.pop %v903
        %v965 = vmul.f32 %v903, %v964
        %vm966 = vcmp.eq.f32.partialorder %v903, inf
        %v967 = vsel %vm966, %v903, %v965
        %vm968 = vcmp.eq.f32.partialorder %v903, 0.0
        %v969 = vand.u32 %v903, 2147483648
        %v970 = vsel %vm968, %v969, %v967
        %v971 = vrsqrt.pop %v905
        %v972 = vmul.f32 %v905, %v971
        %vm973 = vcmp.eq.f32.partialorder %v905, inf
        %v974 = vsel %vm973, %v905, %v972
        %vm975 = vcmp.eq.f32.partialorder %v905, 0.0
        %v976 = vand.u32 %v905, 2147483648
        %v977 = vsel %vm975, %v976, %v974
        %v978 = vrsqrt.pop %v907
        %v979 = vmul.f32 %v907, %v978
        %vm980 = vcmp.eq.f32.partialorder %v907, inf
        %v981 = vsel %vm980, %v907, %v979
        %vm982 = vcmp.eq.f32.partialorder %v907, 0.0
        %v983 = vand.u32 %v907, 2147483648
        %v984 = vsel %vm982, %v983, %v981
        %v985 = vrsqrt.pop %v909
        %v986 = vmul.f32 %v909, %v985
        %vm987 = vcmp.eq.f32.partialorder %v909, inf
        %v988 = vsel %vm987, %v909, %v986
        %vm989 = vcmp.eq.f32.partialorder %v909, 0.0
        %v990 = vand.u32 %v909, 2147483648
        %v991 = vsel %vm989, %v990, %v988
        %v992 = vrsqrt.pop %v911
        %v993 = vmul.f32 %v911, %v992
        %vm994 = vcmp.eq.f32.partialorder %v911, inf
        %v995 = vsel %vm994, %v911, %v993
        %vm996 = vcmp.eq.f32.partialorder %v911, 0.0
        %v997 = vand.u32 %v911, 2147483648
        %v998 = vsel %vm996, %v997, %v995
        %v999 = vrsqrt.pop %v913
        %v1000 = vmul.f32 %v913, %v999
        %vm1001 = vcmp.eq.f32.partialorder %v913, inf
        %v1002 = vsel %vm1001, %v913, %v1000
        %vm1003 = vcmp.eq.f32.partialorder %v913, 0.0
        %v1004 = vand.u32 %v913, 2147483648
        %v1005 = vsel %vm1003, %v1004, %v1002
        %v1006 = vrsqrt.pop %v915
        %v1007 = vmul.f32 %v915, %v1006
        %vm1008 = vcmp.eq.f32.partialorder %v915, inf
        %v1009 = vsel %vm1008, %v915, %v1007
        %vm1010 = vcmp.eq.f32.partialorder %v915, 0.0
        %v1011 = vand.u32 %v915, 2147483648
        %v1012 = vsel %vm1010, %v1011, %v1009
        %v1013 = vrsqrt.pop %v917
        %v1014 = vmul.f32 %v917, %v1013
        %vm1015 = vcmp.eq.f32.partialorder %v917, inf
        %v1016 = vsel %vm1015, %v917, %v1014
        %vm1017 = vcmp.eq.f32.partialorder %v917, 0.0
        %v1018 = vand.u32 %v917, 2147483648
        %v1019 = vsel %vm1017, %v1018, %v1016
        %v1020 = vrsqrt.pop %v919
        %v1021 = vmul.f32 %v919, %v1020
        %vm1022 = vcmp.eq.f32.partialorder %v919, inf
        %v1023 = vsel %vm1022, %v919, %v1021
        %vm1024 = vcmp.eq.f32.partialorder %v919, 0.0
        %v1025 = vand.u32 %v919, 2147483648
        %v1026 = vsel %vm1024, %v1025, %v1023
        %v1027 = vrsqrt.pop %v921
        %v1028 = vmul.f32 %v921, %v1027
        %vm1029 = vcmp.eq.f32.partialorder %v921, inf
        %v1030 = vsel %vm1029, %v921, %v1028
        %vm1031 = vcmp.eq.f32.partialorder %v921, 0.0
        %v1032 = vand.u32 %v921, 2147483648
        %v1033 = vsel %vm1031, %v1032, %v1030
        %v1050 = vlaneseq
        %v1051 = vand.u32 %v1050, 127
        %v1052 = vlaneseq
        %v1053 = vshrl.u32 %v1052, 7
        %v1054 = vsub.s32 %v1051, %v1053
        %v1055 = vrot.slane %v768, %v1054
        %v1056 = vadd.s32 %v1051, 4294967288
        %v1057 = vlaneseq
        %v1058 = vshrl.u32 %v1057, 7
        %v1059 = vsub.s32 %v1056, %v1058
        %v1060 = vrot.slane %v775, %v1059
        %vm1061 = vcmask 130112
        %v1062 = vsel %vm1061, %v1060, %v1055
        %v1063 = vadd.s32 %v1051, 4294967280
        %v1064 = vlaneseq
        %v1065 = vshrl.u32 %v1064, 7
        %v1066 = vsub.s32 %v1063, %v1065
        %v1067 = vrot.slane %v782, %v1066
        %vm1068 = vcmask 195712
        %v1069 = vsel %vm1068, %v1067, %v1062
        %v1070 = vadd.s32 %v1051, 4294967272
        %v1071 = vlaneseq
        %v1072 = vshrl.u32 %v1071, 7
        %v1073 = vsub.s32 %v1070, %v1072
        %v1074 = vrot.slane %v789, %v1073
        %vm1075 = vcmask 261312
        %v1076 = vsel %vm1075, %v1074, %v1069
        %v1077 = vadd.s32 %v1051, 4294967264
        %v1078 = vlaneseq
        %v1079 = vshrl.u32 %v1078, 7
        %v1080 = vsub.s32 %v1077, %v1079
        %v1081 = vrot.slane %v796, %v1080
        %vm1082 = vcmask 326912
        %v1083 = vsel %vm1082, %v1081, %v1076
        %v1084 = vadd.s32 %v1051, 4294967256
        %v1085 = vlaneseq
        %v1086 = vshrl.u32 %v1085, 7
        %v1087 = vsub.s32 %v1084, %v1086
        %v1088 = vrot.slane %v803, %v1087
        %vm1089 = vcmask 392512
        %v1090 = vsel %vm1089, %v1088, %v1083
        %v1091 = vadd.s32 %v1051, 4294967248
        %v1092 = vlaneseq
        %v1093 = vshrl.u32 %v1092, 7
        %v1094 = vsub.s32 %v1091, %v1093
        %v1095 = vrot.slane %v810, %v1094
        %vm1096 = vcmask 458112
        %v1097 = vsel %vm1096, %v1095, %v1090
        %v1098 = vadd.s32 %v1051, 4294967240
        %v1099 = vlaneseq
        %v1100 = vshrl.u32 %v1099, 7
        %v1101 = vsub.s32 %v1098, %v1100
        %v1102 = vrot.slane %v817, %v1101
        %vm1103 = vcmask 523712
        %v1104 = vsel %vm1103, %v1102, %v1097
        %v1105 = vadd.s32 %v1051, 4294967232
        %v1106 = vlaneseq
        %v1107 = vshrl.u32 %v1106, 7
        %v1108 = vsub.s32 %v1105, %v1107
        %v1109 = vrot.slane %v824, %v1108
        %vm1110 = vcmask 589312
        %v1111 = vsel %vm1110, %v1109, %v1104
        %v1112 = vadd.s32 %v1051, 4294967224
        %v1113 = vlaneseq
        %v1114 = vshrl.u32 %v1113, 7
        %v1115 = vsub.s32 %v1112, %v1114
        %v1116 = vrot.slane %v831, %v1115
        %vm1117 = vcmask 654912
        %v1118 = vsel %vm1117, %v1116, %v1111
        %v1119 = vadd.s32 %v1051, 4294967216
        %v1120 = vlaneseq
        %v1121 = vshrl.u32 %v1120, 7
        %v1122 = vsub.s32 %v1119, %v1121
        %v1123 = vrot.slane %v838, %v1122
        %vm1124 = vcmask 720512
        %v1125 = vsel %vm1124, %v1123, %v1118
        %v1126 = vadd.s32 %v1051, 4294967208
        %v1127 = vlaneseq
        %v1128 = vshrl.u32 %v1127, 7
        %v1129 = vsub.s32 %v1126, %v1128
        %v1130 = vrot.slane %v845, %v1129
        %vm1131 = vcmask 786112
        %v1132 = vsel %vm1131, %v1130, %v1125
        %v1133 = vadd.s32 %v1051, 4294967200
        %v1134 = vlaneseq
        %v1135 = vshrl.u32 %v1134, 7
        %v1136 = vsub.s32 %v1133, %v1135
        %v1137 = vrot.slane %v852, %v1136
        %vm1138 = vcmask 851712
        %v1139 = vsel %vm1138, %v1137, %v1132
        %v1140 = vadd.s32 %v1051, 4294967192
        %v1141 = vlaneseq
        %v1142 = vshrl.u32 %v1141, 7
        %v1143 = vsub.s32 %v1140, %v1142
        %v1144 = vrot.slane %v859, %v1143
        %vm1145 = vcmask 917312
        %v1146 = vsel %vm1145, %v1144, %v1139
        %v1147 = vadd.s32 %v1051, 4294967184
        %v1148 = vlaneseq
        %v1149 = vshrl.u32 %v1148, 7
        %v1150 = vsub.s32 %v1147, %v1149
        %v1151 = vrot.slane %v866, %v1150
        %vm1152 = vcmask 982912
        %v1153 = vsel %vm1152, %v1151, %v1146
        %v1154 = vadd.s32 %v1051, 4294967176
        %v1155 = vlaneseq
        %v1156 = vshrl.u32 %v1155, 7
        %v1157 = vsub.s32 %v1154, %v1156
        %v1158 = vrot.slane %v873, %v1157
        %vm1159 = vcmask 1048512
        %v1160 = vsel %vm1159, %v1158, %v1153
        %v1178 = vlaneseq
        %v1179 = vshrl.u32 %v1178, 7
        %v1180 = vsub.s32 %v1051, %v1179
        %v1181 = vrot.slane %v928, %v1180
        %v1182 = vlaneseq
        %v1183 = vshrl.u32 %v1182, 7
        %v1184 = vsub.s32 %v1056, %v1183
        %v1185 = vrot.slane %v935, %v1184
        %v1186 = vsel %vm1061, %v1185, %v1181
        %v1187 = vlaneseq
        %v1188 = vshrl.u32 %v1187, 7
        %v1189 = vsub.s32 %v1063, %v1188
        %v1190 = vrot.slane %v942, %v1189
        %v1191 = vsel %vm1068, %v1190, %v1186
        %v1192 = vlaneseq
        %v1193 = vshrl.u32 %v1192, 7
        %v1194 = vsub.s32 %v1070, %v1193
        %v1195 = vrot.slane %v949, %v1194
        %v1196 = vsel %vm1075, %v1195, %v1191
        %v1197 = vlaneseq
        %v1198 = vshrl.u32 %v1197, 7
        %v1199 = vsub.s32 %v1077, %v1198
        %v1200 = vrot.slane %v956, %v1199
        %v1201 = vsel %vm1082, %v1200, %v1196
        %v1202 = vlaneseq
        %v1203 = vshrl.u32 %v1202, 7
        %v1204 = vsub.s32 %v1084, %v1203
        %v1205 = vrot.slane %v963, %v1204
        %v1206 = vsel %vm1089, %v1205, %v1201
        %v1207 = vlaneseq
        %v1208 = vshrl.u32 %v1207, 7
        %v1209 = vsub.s32 %v1091, %v1208
        %v1210 = vrot.slane %v970, %v1209
        %v1211 = vsel %vm1096, %v1210, %v1206
        %v1212 = vlaneseq
        %v1213 = vshrl.u32 %v1212, 7
        %v1214 = vsub.s32 %v1098, %v1213
        %v1215 = vrot.slane %v977, %v1214
        %v1216 = vsel %vm1103, %v1215, %v1211
        %v1217 = vlaneseq
        %v1218 = vshrl.u32 %v1217, 7
        %v1219 = vsub.s32 %v1105, %v1218
        %v1220 = vrot.slane %v984, %v1219
        %v1221 = vsel %vm1110, %v1220, %v1216
        %v1222 = vlaneseq
        %v1223 = vshrl.u32 %v1222, 7
        %v1224 = vsub.s32 %v1112, %v1223
        %v1225 = vrot.slane %v991, %v1224
        %v1226 = vsel %vm1117, %v1225, %v1221
        %v1227 = vlaneseq
        %v1228 = vshrl.u32 %v1227, 7
        %v1229 = vsub.s32 %v1119, %v1228
        %v1230 = vrot.slane %v998, %v1229
        %v1231 = vsel %vm1124, %v1230, %v1226
        %v1232 = vlaneseq
        %v1233 = vshrl.u32 %v1232, 7
        %v1234 = vsub.s32 %v1126, %v1233
        %v1235 = vrot.slane %v1005, %v1234
        %v1236 = vsel %vm1131, %v1235, %v1231
        %v1237 = vlaneseq
        %v1238 = vshrl.u32 %v1237, 7
        %v1239 = vsub.s32 %v1133, %v1238
        %v1240 = vrot.slane %v1012, %v1239
        %v1241 = vsel %vm1138, %v1240, %v1236
        %v1242 = vlaneseq
        %v1243 = vshrl.u32 %v1242, 7
        %v1244 = vsub.s32 %v1140, %v1243
        %v1245 = vrot.slane %v1019, %v1244
        %v1246 = vsel %vm1145, %v1245, %v1241
        %v1247 = vlaneseq
        %v1248 = vshrl.u32 %v1247, 7
        %v1249 = vsub.s32 %v1147, %v1248
        %v1250 = vrot.slane %v1026, %v1249
        %v1251 = vsel %vm1152, %v1250, %v1246
        %v1252 = vlaneseq
        %v1253 = vshrl.u32 %v1252, 7
        %v1254 = vsub.s32 %v1154, %v1253
        %v1255 = vrot.slane %v1033, %v1254
        %v1256 = vsel %vm1159, %v1255, %v1251
        %vm1258 = vcmask 1040384
        %v1259 = vsel %vm1258, %v1160, %v1256
        %1260 = vst [vmem:[%s380] sm:$0x3] %v1259
        %s1261 = sand.u32 %s152, 1
        %s1262 = scalar_lea.sflag [#allocation4], %s1261
        %s1263 = sand.u32 %s152, 1
        %s1264 = smul.addr %s1263, 128
        %s1265 = scalar_lea.vmem [#allocation5], %s1264
        %p1266 = scmp.lt.s32.totalorder %s24, 2
        %s1267 = scalar_select %p1266, %s24, 2
        %s1268 = smul.addr %s1267, 2
        %s1269 = scalar_lea.vmem %s6, %s1268
        // Predicated region
        $region45: #{triplet_network.1} parent=39 // pred_check
          %p1270 = pneg %p162
        $region46: #{triplet_network.1} parent=39 // pred_check_branch
          %1272 = sbr.rel (%p1270) target = $region48
        $region47: #{triplet_network.1} parent=39 // pred_region
          %s1273 = smul.u32 16, %s24
          %s1274 = ssub.s32 40, %s1273
          %p1275 = scmp.lt.s32.totalorder %s1274, 16
          %s1276 = scalar_select %p1275, %s1274, 16
          %s1277 = smul.u32 128, %s1276
          %s1279 = ssub.s32 2048, %s1277
          %1280 = vsyncadd %s1262, %s1279
          %p1281 = scmp.ne.s32.totalorder 0, %s1277
          %s1282 = smul.addr %s1273, 128
          %s1283 = scalar_lea.hbm %s5, %s1282
          %s1284 = smul.u32 8, %s1276
          %s1285 = sshll.u32 %s1265, 4
          %s1286 = int_to_ptr.vmem [resolvable:$true] %s1285
          %s1287 = sshll.u32 %s1284, 4
          %1291 = dma.vmem_to_hbm [thread:$0]  (%p1281), %s1286, %s1287, %s1283, %s1262, 128, 128, 8
        $region48: #{triplet_network.1} parent=39 // pred_fallthru
          _
        // Predicated region
        $region49: #{triplet_network.1} parent=39 // pred_check
          %p1292 = pneg %p188
        $region50: #{triplet_network.1} parent=39 // pred_check_branch
          %1294 = sbr.rel (%p1292) target = $region52
        $region51: #{triplet_network.1} parent=39 // pred_region
          _
        $region52: #{triplet_network.1} parent=39 // pred_fallthru
          _
      $region40: #{triplet_network.1} parent=5 // pred_fallthru
        _
      %p1295 = scmp.le.s32.totalorder 2, %s19
      // Predicated region
      $region53: #{triplet_network.1} parent=5 // pred_check
        %p1296 = pneg %p1295
      $region54: #{triplet_network.1} parent=5 // pred_check_branch
        %1298 = sbr.rel (%p1296) target = $region56
      $region55: #{triplet_network.1} parent=5 // pred_region
        %s1299 = ssub.s32 %s19, 2
        // Predicated region
        $region57: #{triplet_network.1} parent=55 // pred_check
          %p1300 = pneg %p168
        $region58: #{triplet_network.1} parent=55 // pred_check_branch
          %1302 = sbr.rel (%p1300) target = $region60
        $region59: #{triplet_network.1} parent=55 // pred_region
          %s1303 = sand.u32 %s153, 1
          %s1304 = scalar_lea.sflag [#allocation4], %s1303
          %s1305 = sand.u32 %s153, 1
          %s1306 = smul.addr %s1305, 128
          %s1307 = scalar_lea.vmem [#allocation5], %s1306
          %1308 = dma.done %s1304, 2048
        $region60: #{triplet_network.1} parent=55 // pred_fallthru
          _
        // Predicated region
        $region61: #{triplet_network.1} parent=55 // pred_check
          %p1309 = pneg %p194
        $region62: #{triplet_network.1} parent=55 // pred_check_branch
          %1311 = sbr.rel (%p1309) target = $region64
        $region63: #{triplet_network.1} parent=55 // pred_region
          %p1312 = scmp.lt.s32.totalorder %s25, 2
          %s1313 = scalar_select %p1312, %s25, 2
          %s1314 = smul.addr %s1313, 2
          %s1315 = scalar_lea.vmem %s6, %s1314
        $region64: #{triplet_network.1} parent=55 // pred_fallthru
          _
      $region56: #{triplet_network.1} parent=5 // pred_fallthru
        _
    $region6: #{triplet_network.1} parent=1 // loop_footer
      %s23 = sadd.s32 1, %s19
    $region7: #{triplet_network.1} parent=1 // loop_footer_branch
      %18 = sbr.rel target = $region3
    $region8: #{triplet_network.1} parent=1 // loop_exit
      _
    %1316 = vsyncpa [#allocation3], 1
    %s1317 = scalar_lea.sflag [#allocation3], 1
    %1318 = vsyncpa %s1317, 1
    %1319 = vsyncpa [#allocation4], 1
    %s1320 = scalar_lea.sflag [#allocation4], 1
    %1321 = vsyncpa %s1320, 1

</llo_original>
